<compile_context>
chip_gen: v6e
topology: v6e:2x2x1
jax: 0.10.0
libtpu: 0.0.40
codegen_flags: <defaults>
</compile_context>

<pallas_src>
import functools

import jax
import jax.numpy as jnp
from jax.experimental import pallas as pl
from jax.experimental.pallas import tpu as pltpu

LANE = 128     # lane-dense output width (num_labels padded up to this)
MAX_TM = 512   # batch-tile cap (VMEM-safe on v7x's 32 MiB scoped default)
MAX_TH = 512   # hidden-dim chunk width (bounds the (tm, th) f32 intermediate)


# ----------------------------------------------------------------------------
# Pallas kernel: fused (folded-fc1) -> ReLU -> fc2, lane-dense output
# ----------------------------------------------------------------------------
def head_kernel(x_ref, w1_ref, b1_ref, w2_ref, b2_ref, o_ref, *, th):
    # x_ref : (tm, E)    bfloat16  pooled "bert" activations (cast in wrapper)
    # w1_ref: (E, H)     bfloat16  folded fc1 weight  (wb @ w1)
    # b1_ref: (1, H)     float32   folded fc1 bias    (bb @ w1 + b1)
    # w2_ref: (H, LANE)  bfloat16  fc2 weight, zero-padded to 128 lanes
    # b2_ref: (1, LANE)  float32   fc2 bias,   zero-padded to 128 lanes
    # o_ref : (tm, LANE) float32
    x = x_ref[...]                                   # bf16, no in-kernel cast
    n_chunks = w1_ref.shape[1] // th

    # Initialize the output tile with the (broadcast) fc2 bias, then accumulate
    # per-H-chunk contributions.  Chunking H keeps the live (tm, th) f32
    # intermediate small at H=2048 / large tm (v7x has only 64 MiB VMEM).
    o_ref[...] = jnp.broadcast_to(b2_ref[...], o_ref.shape)

    # Static, short trip count -> plain unrolled loop with static ref slices
    # (zero-cost views; all slice starts are multiples of 128 lanes).
    for k in range(n_chunks):
        s = k * th
        h = jnp.dot(x, w1_ref[:, s:s + th],
                    preferred_element_type=jnp.float32)          # (tm, th) f32
        h = jnp.maximum(h + b1_ref[:, s:s + th], 0.0)            # bias + ReLU
        o_ref[...] += jnp.dot(h.astype(jnp.bfloat16),
                              w2_ref[s:s + th, :],
                              preferred_element_type=jnp.float32)  # (tm, LANE)


def _pick_tm(batch):
    """Large batch tiles (amortize ~0.35 us/step pipeline overhead) while
    producing >=2 tiles whenever possible so v7x's two TensorCores both get
    work through the 'parallel' grid axis.  Multiple of 8 (sublane rule)."""
    if batch <= 8:
        return 8
    half = -(-batch // 2)                      # ceil(batch / 2)
    return min(MAX_TM, ((half + 7) // 8) * 8)


def _pick_th(hidden):
    """Hidden-dim chunk: divides H, multiple of 128, at most MAX_TH."""
    if hidden <= MAX_TH:
        return hidden
    for th in (512, 256, 128):
        if hidden % th == 0:
            return th
    return hidden   # fallback: no chunking


def mlp_head(pooled_bf16, w1f, b1f, w2p, b2p):
    """pooled_bf16: (B, E) bf16 -> lane-dense logits: (B, LANE) f32."""
    B, E = pooled_bf16.shape
    H = w1f.shape[1]
    LP = w2p.shape[1]

    tm = _pick_tm(B)
    th = _pick_th(H)

    # Support any batch size: pad to a multiple of tm, slice padded rows off.
    n_tiles = pl.cdiv(B, tm)
    Bp = n_tiles * tm
    if Bp != B:
        pooled_bf16 = jnp.pad(pooled_bf16, ((0, Bp - B), (0, 0)))

    # Weights never change block index across the grid -> single buffer.
    resident = pl.Buffered(1)

    out = pl.pallas_call(
        functools.partial(head_kernel, th=th),
        out_shape=jax.ShapeDtypeStruct((Bp, LP), jnp.float32),
        grid_spec=pltpu.PrefetchScalarGridSpec(
            num_scalar_prefetch=0,
            grid=(n_tiles,),
            in_specs=[
                pl.BlockSpec((tm, E), lambda i: (i, 0)),   # streamed batch tiles
                pl.BlockSpec((E, H), lambda i: (0, 0), pipeline_mode=resident),
                pl.BlockSpec((1, H), lambda i: (0, 0), pipeline_mode=resident),
                pl.BlockSpec((H, LP), lambda i: (0, 0), pipeline_mode=resident),
                pl.BlockSpec((1, LP), lambda i: (0, 0), pipeline_mode=resident),
            ],
            out_specs=pl.BlockSpec((tm, LP), lambda i: (i, 0)),
        ),
        compiler_params=pltpu.CompilerParams(
            dimension_semantics=("parallel",),   # v7x: batch tiles on both TCs
        ),
    )(pooled_bf16, w1f, b1f, w2p, b2p)

    return out[:B] if Bp != B else out


# ----------------------------------------------------------------------------
# Deterministic parameter construction + stand-in "bert"
# ----------------------------------------------------------------------------
def init_params(key, hidden_dim, num_labels, vocab_size, emb_dim):
    assert num_labels <= LANE, "lane-dense padding assumes num_labels <= 128"
    ks = jax.random.split(key, 7)
    # TODO(synk): the real pretrained BERT backbone has no in-script Pallas
    # equivalent; this deterministic stand-in only supplies the (B, 3) logits
    # the head consumes.
    emb = jax.random.normal(ks[0], (vocab_size, emb_dim), jnp.float32) * 0.02
    wb = jax.random.normal(ks[1], (emb_dim, 3), jnp.float32) * 0.1
    bb = jax.random.normal(ks[2], (3,), jnp.float32) * 0.01
    # fc1: Linear(3, hidden_dim) -- stored (in, out)
    bound1 = 1.0 / jnp.sqrt(3.0)
    w1 = jax.random.uniform(ks[3], (3, hidden_dim), jnp.float32, -bound1, bound1)
    b1 = jax.random.uniform(ks[4], (1, hidden_dim), jnp.float32, -bound1, bound1)
    # fc2: Linear(hidden_dim, num_labels)
    bound2 = 1.0 / jnp.sqrt(float(hidden_dim))
    w2 = jax.random.uniform(ks[5], (hidden_dim, num_labels), jnp.float32,
                            -bound2, bound2)
    b2 = jax.random.uniform(ks[6], (1, num_labels), jnp.float32,
                            -bound2, bound2)

    # --- algebraic fold of the 3-wide bottleneck (exact: no nonlinearity
    # between the stand-in projection and fc1; ReLU stays after the fold) ---
    w1f = (wb @ w1)                                       # (E, H)
    b1f = (bb @ w1)[None, :] + b1                         # (1, H)

    # --- lane-dense padding of fc2 to 128 output lanes ---
    w2p = jnp.zeros((hidden_dim, LANE), jnp.float32).at[:, :num_labels].set(w2)
    b2p = jnp.zeros((1, LANE), jnp.float32).at[:, :num_labels].set(b2)

    return dict(
        emb=emb, wb=wb, bb=bb, w1=w1, b1=b1, w2=w2, b2=b2,
        # kernel-side (folded / padded / bf16 weights)
        w1f=w1f.astype(jnp.bfloat16),
        b1f=b1f,
        w2p=w2p.astype(jnp.bfloat16),
        b2p=b2p,
    )


def standin_bert_pooled(params, token_ids):
    """Plain-JAX glue: (B, S) int32 token ids -> (B, E) pooled activations."""
    e = params["emb"][token_ids]          # gather, (B, S, E)
    return jnp.mean(e, axis=1)            # (B, E)


@functools.partial(jax.jit, static_argnums=(2,))
def forward(params, token_ids, num_labels):
    pooled = standin_bert_pooled(params, token_ids)               # (B, E) f32
    # Producer-side bf16 cast: halves the per-step streamed-input DMA and
    # removes the in-kernel cast; MXU path is bf16 either way.
    logits_padded = mlp_head(pooled.astype(jnp.bfloat16),
                             params["w1f"], params["b1f"],
                             params["w2p"], params["b2p"])        # (B, LANE)
    # "cat_direct": combined_embeddings == text_embeddings (folded into W1').
    return logits_padded[:, :num_labels]                          # (B, L)


# ----------------------------------------------------------------------------
# Main
# ----------------------------------------------------------------------------
if __name__ == "__main__":
    # Demo-sized constants (module default hidden_dim is 2048; tm/th logic is
    # tuned for the real sizes but exercised here at small shapes).
    HIDDEN_DIM = 256
    NUM_LABELS = 3
    VOCAB, EMB = 50, 32
    B, S = 12, 16        # B=12 exercises the 2-tile grid AND the batch padding

    key = jax.random.PRNGKey(0)
    pkey, dkey = jax.random.split(key)
    params = init_params(pkey, HIDDEN_DIM, NUM_LABELS, VOCAB, EMB)
    token_ids = jax.random.randint(dkey, (B, S), 0, VOCAB, dtype=jnp.int32)

    out = forward(params, token_ids, NUM_LABELS)
    jax.block_until_ready(out)

    # Pure-JAX reference mirroring the kernel's exact math
    # (folded weights, bf16 MXU operands, f32 accumulation / elementwise).
    pooled_bf16 = standin_bert_pooled(params, token_ids).astype(jnp.bfloat16)
    h_ref = jnp.maximum(
        jnp.dot(pooled_bf16, params["w1f"],
                preferred_element_type=jnp.float32) + params["b1f"], 0.0)
    ref = (jnp.dot(h_ref.astype(jnp.bfloat16), params["w2p"],
                   preferred_element_type=jnp.float32)
           + params["b2p"])[:, :NUM_LABELS]

    assert out.shape == (B, NUM_LABELS)
    assert jnp.allclose(out, ref, atol=1e-2, rtol=1e-2), (
        "kernel output mismatch vs reference")

    print("KERNEL_OK")
</pallas_src>

<mosaic_0001>
module attributes {stable_mosaic.version = 11 : i64} {
  func.func @head_kernel(%arg0: i32, %arg1: memref<8x32xbf16, #tpu.memory_space<vmem>>, %arg2: memref<32x256xbf16, #tpu.memory_space<vmem>>, %arg3: memref<1x256xf32, #tpu.memory_space<vmem>>, %arg4: memref<256x128xbf16, #tpu.memory_space<vmem>>, %arg5: memref<1x128xf32, #tpu.memory_space<vmem>>, %arg6: memref<8x128xf32, #tpu.memory_space<vmem>>) attributes {dimension_semantics = [#tpu.dimension_semantics<parallel>], iteration_bounds = array<i64: 2>, scalar_prefetch = 0 : i64, scratch_operands = 0 : i64, tpu.core_type = #tpu.core_type<tc>, window_params = [{transform_indices = @transform_0, window_bounds = array<i64: 8, 32>}, {pipeline_mode = #tpu.pipeline_mode<synchronous>, transform_indices = @transform_1, window_bounds = array<i64: 32, 256>}, {pipeline_mode = #tpu.pipeline_mode<synchronous>, transform_indices = @transform_2, window_bounds = array<i64: 1, 256>}, {pipeline_mode = #tpu.pipeline_mode<synchronous>, transform_indices = @transform_3, window_bounds = array<i64: 256, 128>}, {pipeline_mode = #tpu.pipeline_mode<synchronous>, transform_indices = @transform_4, window_bounds = array<i64: 1, 128>}, {transform_indices = @transform_5, window_bounds = array<i64: 8, 128>}]} {
    %c0 = arith.constant 0 : index
    %c0_0 = arith.constant 0 : index
    %0 = vector.load %arg1[%c0, %c0_0] : memref<8x32xbf16, #tpu.memory_space<vmem>>, vector<8x32xbf16>
    %c0_1 = arith.constant 0 : index
    %c0_2 = arith.constant 0 : index
    %1 = vector.load %arg5[%c0_1, %c0_2] : memref<1x128xf32, #tpu.memory_space<vmem>>, vector<1x128xf32>
    %2 = vector.shape_cast %1 : vector<1x128xf32> to vector<1x128xf32>
    %3 = vector.broadcast %2 : vector<1x128xf32> to vector<8x128xf32>
    %c0_3 = arith.constant 0 : index
    %c0_4 = arith.constant 0 : index
    %4 = vector.load %arg6[%c0_3, %c0_4] : memref<8x128xf32, #tpu.memory_space<vmem>>, vector<8x128xf32>
    tpu.vector_store %arg6[%c0_3, %c0_4], %3 {strides = array<i32>} : memref<8x128xf32, #tpu.memory_space<vmem>>, vector<8x128xf32>,
    %c0_5 = arith.constant 0 : index
    %c0_6 = arith.constant 0 : index
    %5 = vector.load %arg2[%c0_5, %c0_6] : memref<32x256xbf16, #tpu.memory_space<vmem>>, vector<32x256xbf16>
    %cst = arith.constant dense<0.000000e+00> : vector<8x256xf32>
    %6 = tpu.matmul %0, %5, %cst {dimension_numbers = #tpu.dot_dimension_numbers<[1], [0], [0], [1], [0, 0, 1, 1], [], []>} : vector<8x32xbf16>, vector<32x256xbf16>, vector<8x256xf32> -> vector<8x256xf32>
    %c0_7 = arith.constant 0 : index
    %c0_8 = arith.constant 0 : index
    %7 = vector.load %arg3[%c0_7, %c0_8] : memref<1x256xf32, #tpu.memory_space<vmem>>, vector<1x256xf32>
    %8 = vector.broadcast %7 : vector<1x256xf32> to vector<8x256xf32>
    %9 = arith.addf %6, %8 : vector<8x256xf32>
    %cst_9 = arith.constant 0.000000e+00 : f32
    %10 = vector.broadcast %cst_9 : f32 to vector<8x256xf32>
    %11 = arith.maximumf %9, %10 : vector<8x256xf32>
    %c0_10 = arith.constant 0 : index
    %c0_11 = arith.constant 0 : index
    %12 = vector.load %arg6[%c0_10, %c0_11] : memref<8x128xf32, #tpu.memory_space<vmem>>, vector<8x128xf32>
    %13 = arith.truncf %11 : vector<8x256xf32> to vector<8x256xbf16>
    %c0_12 = arith.constant 0 : index
    %c0_13 = arith.constant 0 : index
    %14 = vector.load %arg4[%c0_12, %c0_13] : memref<256x128xbf16, #tpu.memory_space<vmem>>, vector<256x128xbf16>
    %cst_14 = arith.constant dense<0.000000e+00> : vector<8x128xf32>
    %15 = tpu.matmul %13, %14, %cst_14 {dimension_numbers = #tpu.dot_dimension_numbers<[1], [0], [0], [1], [0, 0, 1, 1], [], []>} : vector<8x256xbf16>, vector<256x128xbf16>, vector<8x128xf32> -> vector<8x128xf32>
    %16 = arith.addf %12, %15 : vector<8x128xf32>
    %c0_15 = arith.constant 0 : index
    %c0_16 = arith.constant 0 : index
    %17 = vector.load %arg6[%c0_15, %c0_16] : memref<8x128xf32, #tpu.memory_space<vmem>>, vector<8x128xf32>
    tpu.vector_store %arg6[%c0_15, %c0_16], %16 {strides = array<i32>} : memref<8x128xf32, #tpu.memory_space<vmem>>, vector<8x128xf32>,
    return
  }
  func.func @transform_0(%arg0: i32) -> (i32, i32) {
    %c0_i32 = arith.constant 0 : i32
    %c0_i32_0 = arith.constant 0 : i32
    return %arg0, %c0_i32 : i32, i32
  }
  func.func @transform_1(%arg0: i32) -> (i32, i32) {
    %c0_i32 = arith.constant 0 : i32
    %c0_i32_0 = arith.constant 0 : i32
    %c0_i32_1 = arith.constant 0 : i32
    return %c0_i32, %c0_i32_0 : i32, i32
  }
  func.func @transform_2(%arg0: i32) -> (i32, i32) {
    %c0_i32 = arith.constant 0 : i32
    %c0_i32_0 = arith.constant 0 : i32
    %c0_i32_1 = arith.constant 0 : i32
    return %c0_i32, %c0_i32_0 : i32, i32
  }
  func.func @transform_3(%arg0: i32) -> (i32, i32) {
    %c0_i32 = arith.constant 0 : i32
    %c0_i32_0 = arith.constant 0 : i32
    %c0_i32_1 = arith.constant 0 : i32
    return %c0_i32, %c0_i32_0 : i32, i32
  }
  func.func @transform_4(%arg0: i32) -> (i32, i32) {
    %c0_i32 = arith.constant 0 : i32
    %c0_i32_0 = arith.constant 0 : i32
    %c0_i32_1 = arith.constant 0 : i32
    return %c0_i32, %c0_i32_0 : i32, i32
  }
  func.func @transform_5(%arg0: i32) -> (i32, i32) {
    %c0_i32 = arith.constant 0 : i32
    %c0_i32_0 = arith.constant 0 : i32
    return %arg0, %c0_i32 : i32, i32
  }
}

</mosaic_0001>

<llo_original>
// kernel: forward.1
$region0: #{forward.1}
  #allocation0 [shape = 'u32[]', space=smem, size = 0x4, offset = 0x4, fixed_abs, tag = 'smem constant byte address 0x4 - core index']
  #allocation1 [shape = 'u32[144,128]{1,0:T(1,128)}', space=vmem, size = 0x12000, scoped, tag = 'internal scratch']
  %s0 = inlined_call_operand.vmem [shape: bf16[16,32], index: 0, kind: input, shape index: {}]
  %s1 = inlined_call_operand.vmem [shape: bf16[32,256], index: 1, kind: input, shape index: {}]
  %s2 = inlined_call_operand.vmem [shape: f32[1,256], index: 2, kind: input, shape index: {}]
  %s3 = inlined_call_operand.vmem [shape: bf16[256,128], index: 3, kind: input, shape index: {}]
  %s4 = inlined_call_operand.vmem [shape: f32[1,128], index: 4, kind: input, shape index: {}]
  %s5 = inlined_call_operand.vmem [shape: f32[16,128], index: 5, kind: output, shape index: {}]
  %s6 = sld [smem:[#allocation0]]
  $region53: #{forward.1} parent=0
    _
  %s8 = ssub.s32 1, %s6
  %s9 = scalar_select 0, %s8, %s6
  loop: start=0, step=1, limit=4
  $region2: #{forward.1} parent=0 // loop_pre_header
    _
  $region3: #{forward.1} parent=0 // loop_header
    %s11 = sphi 0, %s15
    %p12 = scmp.ge.s32.totalorder %s11, 4
    %s21 = sphi 0, %s23
    %s24 = sphi 0, %s21
    %s25 = sphi 0, %s24
    %s41 = sphi 0, %s25
    %s45 = sphi 0, %s45
    %s47 = sphi 0, %s45
    %s48 = sphi 0, %s47
    %s62 = sphi 0, %s48
    %s66 = sphi 0, %s66
    %s68 = sphi 0, %s66
    %s69 = sphi 0, %s68
    %s83 = sphi 0, %s69
    %s87 = sphi 0, %s87
    %s89 = sphi 0, %s87
    %s90 = sphi 0, %s89
    %s104 = sphi 0, %s90
    %s108 = sphi 0, %s108
    %s110 = sphi 0, %s108
    %s111 = sphi 0, %s110
    %s125 = sphi 0, %s111
    %s131 = sphi 0, %s133
    %s134 = sphi 0, %s131
    %s135 = sphi 0, %s134
    %s151 = sphi 0, %s135
  $region4: #{forward.1} parent=0 // loop_header_branch
    %14 = sbr.rel (%p12) target = $region8
  $region5: #{forward.1} parent=0 // loop_body
    %s16 = ssub.s32 %s11, 1
    %s17 = ssub.s32 %s11, 2
    %s18 = sadd.s32 %s11, 1
    %s19 = ssub.s32 %s11, %s18
    %p20 = scmp.eq.s32.totalorder %s19, 0
    %s22 = sadd.s32 %s21, 1
    %s23 = scalar_select %p20, %s21, %s22
    %p26 = pneg %p20
    %p27 = scmp.eq.s32.totalorder %s11, 1
    %p28 = por %p26, %p27
    %p29 = scmp.ne.s32.totalorder %s21, %s24
    %p30 = scmp.eq.s32.totalorder %s11, 0
    %p31 = por %p29, %p30
    %p32 = scmp.ne.s32.totalorder %s21, %s24
    %p33 = scmp.eq.s32.totalorder %s16, 1
    %p34 = por %p32, %p33
    %p35 = scmp.ne.s32.totalorder %s24, %s25
    %p36 = scmp.eq.s32.totalorder %s16, 0
    %p37 = por %p35, %p36
    %p38 = scmp.ne.s32.totalorder %s24, %s25
    %p39 = scmp.eq.s32.totalorder %s17, 1
    %p40 = por %p38, %p39
    %p42 = scmp.ne.s32.totalorder %s25, %s41
    %p43 = scmp.eq.s32.totalorder %s17, 0
    %p44 = por %p42, %p43
    %s46 = sadd.s32 %s45, 1
    %p49 = scmp.eq.s32.totalorder %s11, 1
    %p50 = scmp.ne.s32.totalorder %s45, %s47
    %p51 = scmp.eq.s32.totalorder %s11, 0
    %p52 = por %p50, %p51
    %p53 = scmp.ne.s32.totalorder %s45, %s47
    %p54 = scmp.eq.s32.totalorder %s16, 1
    %p55 = por %p53, %p54
    %p56 = scmp.ne.s32.totalorder %s47, %s48
    %p57 = scmp.eq.s32.totalorder %s16, 0
    %p58 = por %p56, %p57
    %p59 = scmp.ne.s32.totalorder %s47, %s48
    %p60 = scmp.eq.s32.totalorder %s17, 1
    %p61 = por %p59, %p60
    %p63 = scmp.ne.s32.totalorder %s48, %s62
    %p64 = scmp.eq.s32.totalorder %s17, 0
    %p65 = por %p63, %p64
    %s67 = sadd.s32 %s66, 1
    %p70 = scmp.eq.s32.totalorder %s11, 1
    %p71 = scmp.ne.s32.totalorder %s66, %s68
    %p72 = scmp.eq.s32.totalorder %s11, 0
    %p73 = por %p71, %p72
    %p74 = scmp.ne.s32.totalorder %s66, %s68
    %p75 = scmp.eq.s32.totalorder %s16, 1
    %p76 = por %p74, %p75
    %p77 = scmp.ne.s32.totalorder %s68, %s69
    %p78 = scmp.eq.s32.totalorder %s16, 0
    %p79 = por %p77, %p78
    %p80 = scmp.ne.s32.totalorder %s68, %s69
    %p81 = scmp.eq.s32.totalorder %s17, 1
    %p82 = por %p80, %p81
    %p84 = scmp.ne.s32.totalorder %s69, %s83
    %p85 = scmp.eq.s32.totalorder %s17, 0
    %p86 = por %p84, %p85
    %s88 = sadd.s32 %s87, 1
    %p91 = scmp.eq.s32.totalorder %s11, 1
    %p92 = scmp.ne.s32.totalorder %s87, %s89
    %p93 = scmp.eq.s32.totalorder %s11, 0
    %p94 = por %p92, %p93
    %p95 = scmp.ne.s32.totalorder %s87, %s89
    %p96 = scmp.eq.s32.totalorder %s16, 1
    %p97 = por %p95, %p96
    %p98 = scmp.ne.s32.totalorder %s89, %s90
    %p99 = scmp.eq.s32.totalorder %s16, 0
    %p100 = por %p98, %p99
    %p101 = scmp.ne.s32.totalorder %s89, %s90
    %p102 = scmp.eq.s32.totalorder %s17, 1
    %p103 = por %p101, %p102
    %p105 = scmp.ne.s32.totalorder %s90, %s104
    %p106 = scmp.eq.s32.totalorder %s17, 0
    %p107 = por %p105, %p106
    %s109 = sadd.s32 %s108, 1
    %p112 = scmp.eq.s32.totalorder %s11, 1
    %p113 = scmp.ne.s32.totalorder %s108, %s110
    %p114 = scmp.eq.s32.totalorder %s11, 0
    %p115 = por %p113, %p114
    %p116 = scmp.ne.s32.totalorder %s108, %s110
    %p117 = scmp.eq.s32.totalorder %s16, 1
    %p118 = por %p116, %p117
    %p119 = scmp.ne.s32.totalorder %s110, %s111
    %p120 = scmp.eq.s32.totalorder %s16, 0
    %p121 = por %p119, %p120
    %p122 = scmp.ne.s32.totalorder %s110, %s111
    %p123 = scmp.eq.s32.totalorder %s17, 1
    %p124 = por %p122, %p123
    %p126 = scmp.ne.s32.totalorder %s111, %s125
    %p127 = scmp.eq.s32.totalorder %s17, 0
    %p128 = por %p126, %p127
    %s129 = ssub.s32 %s11, %s18
    %p130 = scmp.eq.s32.totalorder %s129, 0
    %s132 = sadd.s32 %s131, 1
    %s133 = scalar_select %p130, %s131, %s132
    %p136 = pneg %p130
    %p137 = scmp.eq.s32.totalorder %s11, 1
    %p138 = por %p136, %p137
    %p139 = scmp.ne.s32.totalorder %s131, %s134
    %p140 = scmp.eq.s32.totalorder %s11, 0
    %p141 = por %p139, %p140
    %p142 = scmp.ne.s32.totalorder %s131, %s134
    %p143 = scmp.eq.s32.totalorder %s16, 1
    %p144 = por %p142, %p143
    %p145 = scmp.ne.s32.totalorder %s134, %s135
    %p146 = scmp.eq.s32.totalorder %s16, 0
    %p147 = por %p145, %p146
    %p148 = scmp.ne.s32.totalorder %s134, %s135
    %p149 = scmp.eq.s32.totalorder %s17, 1
    %p150 = por %p148, %p149
    %p152 = scmp.ne.s32.totalorder %s135, %s151
    %p153 = scmp.eq.s32.totalorder %s17, 0
    %p154 = por %p152, %p153
    %p155 = scmp.le.s32.totalorder 1, %s11
    %p156 = scmp.lt.s32.totalorder %s11, 3
    %p157 = pnand %p155, %p156
    %p158 = pneg %p157
    // Predicated region
    $region9: #{forward.1} parent=5 // pred_check
      _
    $region10: #{forward.1} parent=5 // pred_check_branch
      %160 = sbr.rel (%p157) target = $region12
    $region11: #{forward.1} parent=5 // pred_region
      %s161 = ssub.s32 %s11, 1
      // Predicated region
      $region13: #{forward.1} parent=11 // pred_check
        %p162 = pneg %p58
      $region14: #{forward.1} parent=11 // pred_check_branch
        %164 = sbr.rel (%p162) target = $region16
      $region15: #{forward.1} parent=11 // pred_region
        _
      $region16: #{forward.1} parent=11 // pred_fallthru
        _
      // Predicated region
      $region17: #{forward.1} parent=11 // pred_check
        %p165 = pneg %p79
      $region18: #{forward.1} parent=11 // pred_check_branch
        %167 = sbr.rel (%p165) target = $region20
      $region19: #{forward.1} parent=11 // pred_region
        _
      $region20: #{forward.1} parent=11 // pred_fallthru
        _
      // Predicated region
      $region21: #{forward.1} parent=11 // pred_check
        %p168 = pneg %p100
      $region22: #{forward.1} parent=11 // pred_check_branch
        %170 = sbr.rel (%p168) target = $region24
      $region23: #{forward.1} parent=11 // pred_region
        _
      $region24: #{forward.1} parent=11 // pred_fallthru
        _
      // Predicated region
      $region25: #{forward.1} parent=11 // pred_check
        %p171 = pneg %p121
      $region26: #{forward.1} parent=11 // pred_check_branch
        %173 = sbr.rel (%p171) target = $region28
      $region27: #{forward.1} parent=11 // pred_region
        _
      $region28: #{forward.1} parent=11 // pred_fallthru
        _
    $region12: #{forward.1} parent=5 // pred_fallthru
      _
    %p174 = scmp.lt.s32.totalorder %s11, 2
    // Predicated region
    $region29: #{forward.1} parent=5 // pred_check
      %p175 = pneg %p174
    $region30: #{forward.1} parent=5 // pred_check_branch
      %177 = sbr.rel (%p175) target = $region32
    $region31: #{forward.1} parent=5 // pred_region
      // Predicated region
      $region33: #{forward.1} parent=31 // pred_check
        %p178 = pneg %p31
      $region34: #{forward.1} parent=31 // pred_check_branch
        %180 = sbr.rel (%p178) target = $region36
      $region35: #{forward.1} parent=31 // pred_region
        %p181 = scmp.lt.s32.totalorder %s11, 1
        %s182 = scalar_select %p181, %s11, 1
        %s183 = smul.addr %s182, 4
        %s184 = scalar_lea.vmem %s0, %s183
      $region36: #{forward.1} parent=31 // pred_fallthru
        _
    $region32: #{forward.1} parent=5 // pred_fallthru
      _
    %p185 = scmp.le.s32.totalorder 1, %s11
    %p186 = scmp.lt.s32.totalorder %s11, 3
    %p187 = pnand %p185, %p186
    %p188 = pneg %p187
    // Predicated region
    $region37: #{forward.1} parent=5 // pred_check
      _
    $region38: #{forward.1} parent=5 // pred_check_branch
      %190 = sbr.rel (%p187) target = $region40
    $region39: #{forward.1} parent=5 // pred_region
      %s191 = ssub.s32 %s11, 1
      %p192 = scmp.lt.s32.totalorder %s16, 1
      %s193 = scalar_select %p192, %s16, 1
      %s194 = smul.addr %s193, 4
      %s195 = scalar_lea.vmem %s0, %s194
      %p196 = pneg %p37
      %p197 = pneg %p34
      %p198 = pneg %p58
      %p199 = pneg %p55
      %p200 = pneg %p79
      %p201 = pneg %p76
      %p202 = pneg %p100
      %p203 = pneg %p97
      %p204 = pneg %p121
      %p205 = pneg %p118
      %p206 = pneg %p147
      %p207 = pneg %p144
      %p208 = scmp.lt.s32.totalorder %s16, 1
      %s209 = scalar_select %p208, %s16, 1
      %s210 = smul.addr %s209, 8
      %s211 = scalar_lea.vmem %s5, %s210
      %p212 = scmp.lt.s32.totalorder %s16, 1
      %s213 = scalar_select %p212, %s16, 1
      %s214 = smul.addr %s213, 4
      %s215 = scalar_lea.vmem %s0, %s214
      %p216 = scmp.lt.s32.totalorder %s16, 1
      %s217 = scalar_select %p216, %s16, 1
      %s218 = smul.addr %s217, 8
      %s219 = scalar_lea.vmem %s5, %s218
      %v221 = vld [vmem:[%s215] sm:$0xf]
      %v222 = vld [vmem:[%s4] sm:$0x1]
      %v224 = vlaneseq
      %v225 = vshrl.u32 %v224, 7
      %v226 = vsub.s32 0, %v225
      %v227 = vrot.slane %v222, %v226
      %229 = vst [vmem:[%s219] sm:$0xff] %v227
      %v230 = vld [vmem:[%s1] sm:$0xff]
      %v231 = vld [vmem:[%s1 + $0x8] sm:$0xff]
      %v232 = vld [vmem:[%s1 + $0x10] sm:$0xff]
      %v233 = vld [vmem:[%s1 + $0x18] sm:$0xff]
      %v234 = vld [vmem:[%s2] sm:$0x3]
      %v236 = vlaneseq
      %v237 = vshrl.u32 %v236, 7
      %v238 = vsub.s32 0, %v237
      %v239 = vrot.slane %v234, %v238
      %v240 = vlaneseq
      %v241 = vshrl.u32 %v240, 7
      %v242 = vsub.s32 1, %v241
      %v243 = vrot.slane %v234, %v242
      %v250 = vunpack.c.l.b16 %v230
      %v251 = vunpack.c.h.b16 %v230
      %v252 = vunpack.c.l.b16 %v231
      %v253 = vunpack.c.h.b16 %v231
      %v254 = vunpack.c.l.b16 %v232
      %v255 = vunpack.c.h.b16 %v232
      %v256 = vunpack.c.l.b16 %v233
      %v257 = vunpack.c.h.b16 %v233
      %v258 = vpack.c.b16 %v252, %v250
      %v259 = vpack.c.b16 %v253, %v251
      %v260 = vpack.c.b16 %v256, %v254
      %v261 = vpack.c.b16 %v257, %v255
      %vm266 = vcmask 261120
      %v268 = vsel %vm266, %v221, 0
      %270 = vmatprep.subr.bf16.mxu0 0
      %271 = vmatpush1.bf16.msra.mxu0 0
      %272 = vmatprep.subr.bf16.mxu0 0
      %273 = vmatpush1.bf16.msra.mxu0 0
      %274 = vmatprep.subr.bf16.mxu0 0
      %275 = vmatpush1.bf16.msra.mxu0 0
      %276 = vmatprep.subr.bf16.mxu0 0
      %277 = vmatpush1.bf16.msra.mxu0 0
      %278 = vmatprep.subr.bf16.mxu0 0
      %279 = vmatpush1.bf16.msra.mxu0 0
      %280 = vmatprep.subr.bf16.mxu0 0
      %281 = vmatpush1.bf16.msra.mxu0 0
      %282 = vmatprep.subr.bf16.mxu0 %v261
      %283 = vmatpush1.bf16.msra.mxu0 %v260
      %284 = vmatprep.subr.bf16.mxu0 %v259
      %285 = vmatpush1.bf16.msra.mxu0 %v258
      %286 = vmatprep.subr.bf16.mxu0 0
      %287 = vmatpush2.bf16.msra.mxu0 0
      %288 = vmatprep.subr.bf16.mxu0 0
      %289 = vmatpush2.bf16.msra.mxu0 0
      %290 = vmatprep.subr.bf16.mxu0 0
      %291 = vmatpush2.bf16.msra.mxu0 0
      %292 = vmatprep.subr.bf16.mxu0 0
      %293 = vmatpush2.bf16.msra.mxu0 0
      %294 = vmatprep.subr.bf16.mxu0 0
      %295 = vmatpush2.bf16.msra.mxu0 0
      %296 = vmatprep.subr.bf16.mxu0 0
      %297 = vmatpush2.bf16.msra.mxu0 0
      %298 = vmatprep.subr.bf16.mxu0 0
      %299 = vmatpush2.bf16.msra.mxu0 0
      %300 = vmatprep.subr.bf16.mxu0 0
      %301 = vmatpush2.bf16.msra.mxu0 0
      %302 = vmatprep.mubr.bf16.mxu0 0
      %303 = vmatmul.mubr.bf16.gmra.mxu0 %v268
      %v304 = vpop.f32.mrf.mxu0
      %v305 = vadd.f32 %v239, %v304
      %v306 = vpop.f32.mrf.mxu0
      %v307 = vadd.f32 %v243, %v306
      %v308 = vpop.f32.mrf.mxu0
      %v309 = vpop.f32.mrf.mxu0
      %310 = vdwg.mxu0
      %v311 = vmax.f32 %v305, 0.0
      %v312 = vmax.f32 %v307, 0.0
      %v313 = vld [vmem:[%s219] sm:$0xff]
      %v314 = vpack.c.bf16 %v311, %v311
      %v315 = vpack.c.bf16 %v312, %v312
      %v316 = vld [vmem:[%s3] sm:$0xf]
      %v317 = vld [vmem:[%s3 + $0x4] sm:$0xf]
      %v318 = vld [vmem:[%s3 + $0x8] sm:$0xf]
      %v319 = vld [vmem:[%s3 + $0xc] sm:$0xf]
      %v320 = vld [vmem:[%s3 + $0x10] sm:$0xf]
      %v321 = vld [vmem:[%s3 + $0x14] sm:$0xf]
      %v322 = vld [vmem:[%s3 + $0x18] sm:$0xf]
      %v323 = vld [vmem:[%s3 + $0x1c] sm:$0xf]
      %v324 = vld [vmem:[%s3 + $0x20] sm:$0xf]
      %v325 = vld [vmem:[%s3 + $0x24] sm:$0xf]
      %v326 = vld [vmem:[%s3 + $0x28] sm:$0xf]
      %v327 = vld [vmem:[%s3 + $0x2c] sm:$0xf]
      %v328 = vld [vmem:[%s3 + $0x30] sm:$0xf]
      %v329 = vld [vmem:[%s3 + $0x34] sm:$0xf]
      %v330 = vld [vmem:[%s3 + $0x38] sm:$0xf]
      %v331 = vld [vmem:[%s3 + $0x3c] sm:$0xf]
      %v332 = vld [vmem:[%s3 + $0x40] sm:$0xf]
      %v333 = vld [vmem:[%s3 + $0x44] sm:$0xf]
      %v334 = vld [vmem:[%s3 + $0x48] sm:$0xf]
      %v335 = vld [vmem:[%s3 + $0x4c] sm:$0xf]
      %v336 = vld [vmem:[%s3 + $0x50] sm:$0xf]
      %v337 = vld [vmem:[%s3 + $0x54] sm:$0xf]
      %v338 = vld [vmem:[%s3 + $0x58] sm:$0xf]
      %v339 = vld [vmem:[%s3 + $0x5c] sm:$0xf]
      %v340 = vld [vmem:[%s3 + $0x60] sm:$0xf]
      %v341 = vld [vmem:[%s3 + $0x64] sm:$0xf]
      %v342 = vld [vmem:[%s3 + $0x68] sm:$0xf]
      %v343 = vld [vmem:[%s3 + $0x6c] sm:$0xf]
      %v344 = vld [vmem:[%s3 + $0x70] sm:$0xf]
      %v345 = vld [vmem:[%s3 + $0x74] sm:$0xf]
      %v346 = vld [vmem:[%s3 + $0x78] sm:$0xf]
      %v347 = vld [vmem:[%s3 + $0x7c] sm:$0xf]
      %v380 = vunpack.c.l.b16 %v316
      %v381 = vunpack.c.l.b16 %v317
      %v382 = vunpack.c.l.b16 %v318
      %v383 = vunpack.c.l.b16 %v319
      %v384 = vunpack.c.l.b16 %v320
      %v385 = vunpack.c.l.b16 %v321
      %v386 = vunpack.c.l.b16 %v322
      %v387 = vunpack.c.l.b16 %v323
      %v388 = vunpack.c.l.b16 %v324
      %v389 = vunpack.c.l.b16 %v325
      %v390 = vunpack.c.l.b16 %v326
      %v391 = vunpack.c.l.b16 %v327
      %v392 = vunpack.c.l.b16 %v328
      %v393 = vunpack.c.l.b16 %v329
      %v394 = vunpack.c.l.b16 %v330
      %v395 = vunpack.c.l.b16 %v331
      %v396 = vunpack.c.l.b16 %v332
      %v397 = vunpack.c.l.b16 %v333
      %v398 = vunpack.c.l.b16 %v334
      %v399 = vunpack.c.l.b16 %v335
      %v400 = vunpack.c.l.b16 %v336
      %v401 = vunpack.c.l.b16 %v337
      %v402 = vunpack.c.l.b16 %v338
      %v403 = vunpack.c.l.b16 %v339
      %v404 = vunpack.c.l.b16 %v340
      %v405 = vunpack.c.l.b16 %v341
      %v406 = vunpack.c.l.b16 %v342
      %v407 = vunpack.c.l.b16 %v343
      %v408 = vunpack.c.l.b16 %v344
      %v409 = vunpack.c.l.b16 %v345
      %v410 = vunpack.c.l.b16 %v346
      %v411 = vunpack.c.l.b16 %v347
      %v412 = vpack.c.b16 %v381, %v380
      %v413 = vpack.c.b16 %v383, %v382
      %v414 = vpack.c.b16 %v385, %v384
      %v415 = vpack.c.b16 %v387, %v386
      %v416 = vpack.c.b16 %v389, %v388
      %v417 = vpack.c.b16 %v391, %v390
      %v418 = vpack.c.b16 %v393, %v392
      %v419 = vpack.c.b16 %v395, %v394
      %v420 = vpack.c.b16 %v397, %v396
      %v421 = vpack.c.b16 %v399, %v398
      %v422 = vpack.c.b16 %v401, %v400
      %v423 = vpack.c.b16 %v403, %v402
      %v424 = vpack.c.b16 %v405, %v404
      %v425 = vpack.c.b16 %v407, %v406
      %v426 = vpack.c.b16 %v409, %v408
      %v427 = vpack.c.b16 %v411, %v410
      %444 = vmatprep.subr.bf16.mxu0 0
      %445 = vmatpush1.bf16.msra.mxu0 %v419
      %446 = vmatprep.subr.bf16.mxu0 0
      %447 = vmatpush1.bf16.msra.mxu0 %v418
      %448 = vmatprep.subr.bf16.mxu0 0
      %449 = vmatpush1.bf16.msra.mxu0 %v417
      %450 = vmatprep.subr.bf16.mxu0 0
      %451 = vmatpush1.bf16.msra.mxu0 %v416
      %452 = vmatprep.subr.bf16.mxu0 0
      %453 = vmatpush1.bf16.msra.mxu0 %v415
      %454 = vmatprep.subr.bf16.mxu0 0
      %455 = vmatpush1.bf16.msra.mxu0 %v414
      %456 = vmatprep.subr.bf16.mxu0 0
      %457 = vmatpush1.bf16.msra.mxu0 %v413
      %458 = vmatprep.subr.bf16.mxu0 0
      %459 = vmatpush1.bf16.msra.mxu0 %v412
      %460 = vmatprep.subr.bf16.mxu0 0
      %461 = vmatpush2.bf16.msra.mxu0 %v427
      %462 = vmatprep.subr.bf16.mxu0 0
      %463 = vmatpush2.bf16.msra.mxu0 %v426
      %464 = vmatprep.subr.bf16.mxu0 0
      %465 = vmatpush2.bf16.msra.mxu0 %v425
      %466 = vmatprep.subr.bf16.mxu0 0
      %467 = vmatpush2.bf16.msra.mxu0 %v424
      %468 = vmatprep.subr.bf16.mxu0 0
      %469 = vmatpush2.bf16.msra.mxu0 %v423
      %470 = vmatprep.subr.bf16.mxu0 0
      %471 = vmatpush2.bf16.msra.mxu0 %v422
      %472 = vmatprep.subr.bf16.mxu0 0
      %473 = vmatpush2.bf16.msra.mxu0 %v421
      %474 = vmatprep.subr.bf16.mxu0 0
      %475 = vmatpush2.bf16.msra.mxu0 %v420
      %476 = vmatprep.mubr.bf16.mxu0 %v315
      %477 = vmatmul.mubr.bf16.gmra.mxu0 %v314
      %v478 = vpop.f32.mrf.mxu0
      %v479 = vadd.f32 0.0, %v478
      %v480 = vpop.f32.mrf.mxu0
      %v481 = vpop.f32.mrf.mxu0
      %v482 = vpop.f32.mrf.mxu0
      %483 = vdwg.mxu0
      %v484 = vadd.f32 %v313, %v479
      %485 = vst [vmem:[%s219] sm:$0xff] %v484
      %p486 = scmp.lt.s32.totalorder %s16, 1
      %s487 = scalar_select %p486, %s16, 1
      %s488 = smul.addr %s487, 8
      %s489 = scalar_lea.vmem %s5, %s488
      // Predicated region
      $region41: #{forward.1} parent=39 // pred_check
        %p490 = pneg %p144
      $region42: #{forward.1} parent=39 // pred_check_branch
        %492 = sbr.rel (%p490) target = $region44
      $region43: #{forward.1} parent=39 // pred_region
        _
      $region44: #{forward.1} parent=39 // pred_fallthru
        _
    $region40: #{forward.1} parent=5 // pred_fallthru
      _
    %p493 = scmp.le.s32.totalorder 2, %s11
    // Predicated region
    $region45: #{forward.1} parent=5 // pred_check
      %p494 = pneg %p493
    $region46: #{forward.1} parent=5 // pred_check_branch
      %496 = sbr.rel (%p494) target = $region48
    $region47: #{forward.1} parent=5 // pred_region
      %s497 = ssub.s32 %s11, 2
      // Predicated region
      $region49: #{forward.1} parent=47 // pred_check
        %p498 = pneg %p150
      $region50: #{forward.1} parent=47 // pred_check_branch
        %500 = sbr.rel (%p498) target = $region52
      $region51: #{forward.1} parent=47 // pred_region
        %p501 = scmp.lt.s32.totalorder %s17, 1
        %s502 = scalar_select %p501, %s17, 1
        %s503 = smul.addr %s502, 8
        %s504 = scalar_lea.vmem %s5, %s503
      $region52: #{forward.1} parent=47 // pred_fallthru
        _
    $region48: #{forward.1} parent=5 // pred_fallthru
      _
  $region6: #{forward.1} parent=0 // loop_footer
    %s15 = sadd.s32 1, %s11
  $region7: #{forward.1} parent=0 // loop_footer_branch
    %10 = sbr.rel target = $region3
  $region8: #{forward.1} parent=0 // loop_exit
    _

</llo_original>
